<compile_context>
chip_gen: v5e
topology: v5e:2x2
jax: 0.10.0
libtpu: 0.0.40
codegen_flags: <defaults>
</compile_context>

<pallas_src>
import functools

import jax
import jax.numpy as jnp
import numpy as np
from jax.experimental import pallas as pl
from jax.experimental.pallas import tpu as pltpu


def _round_up(v, m):
    return ((v + m - 1) // m) * m


# --------------------------------------------------------------------------- #
# Kernel: three Linear layers + ReLU + optional clamp, fused in VMEM per tile #
# --------------------------------------------------------------------------- #
def _mlp_kernel(x_ref, w1_ref, b1_ref, w2_ref, b2_ref, w3_ref, b3_ref, o_ref,
                *, clip_lo, clip_hi, do_lo, do_hi):
    # x arrives as f32 (raw activation DMA); cast to bf16 on the VPU for the MXU.
    x = x_ref[...].astype(jnp.bfloat16)                        # (tb, in)

    # Layer 1: x @ W1 + b1, ReLU   (f32 accumulation)
    h1 = jnp.dot(x, w1_ref[...], preferred_element_type=jnp.float32)
    h1 = jnp.maximum(h1 + b1_ref[...], 0.0)                    # (tb, 256) f32

    # Layer 2: h1 @ W2 + b2, ReLU
    h2 = jnp.dot(h1.astype(jnp.bfloat16), w2_ref[...],
                 preferred_element_type=jnp.float32)
    h2 = jnp.maximum(h2 + b2_ref[...], 0.0)                    # (tb, 256) f32

    # Output layer: h2 @ W3 + b3  (W3/b3 lane-padded to a multiple of 128)
    logits = jnp.dot(h2.astype(jnp.bfloat16), w3_ref[...],
                     preferred_element_type=jnp.float32)
    logits = logits + b3_ref[...]

    # Static (trace-time) clip handling: only emit ops for finite bounds.
    if do_lo:
        logits = jnp.maximum(logits, clip_lo)
    if do_hi:
        logits = jnp.minimum(logits, clip_hi)

    o_ref[...] = logits.astype(o_ref.dtype)


# --------------------------------------------------------------------------- #
# One-time parameter packing (do NOT redo this per forward call)              #
# --------------------------------------------------------------------------- #
def prepare_params(params):
    """Cast weights to bf16 (MXU operands), keep biases f32, and lane-pad the
    output layer to a multiple of 128 (lane-dense stores / full MXU column
    tile). Call once and reuse the result for every forward call."""
    w3, b3 = params["w3"], params["b3"]
    out_size = int(w3.shape[1])
    out_pad = _round_up(max(out_size, 128), 128)
    if out_pad != out_size:
        w3 = jnp.zeros((w3.shape[0], out_pad), w3.dtype).at[:, :out_size].set(w3)
        b3 = jnp.zeros((1, out_pad), b3.dtype).at[:, :out_size].set(b3)
    return {
        "w1": params["w1"].astype(jnp.bfloat16),
        "b1": params["b1"].astype(jnp.float32),
        "w2": params["w2"].astype(jnp.bfloat16),
        "b2": params["b2"].astype(jnp.float32),
        "w3": w3.astype(jnp.bfloat16),
        "b3": b3.astype(jnp.float32),
        "out_size": out_size,
        "out_pad": out_pad,
    }


# --------------------------------------------------------------------------- #
# Batch-tile heuristic                                                        #
# --------------------------------------------------------------------------- #
def _large_block_cap():
    # v5e: keep tiles <= 256 (f32 intermediates spill through its single
    # vector-store slot). v6e/v7x: allow 512 to amortize per-grid-step overhead
    # at very large batch (footprint stays far below 64 MiB VMEM).
    try:
        kind = jax.devices()[0].device_kind.lower()
    except Exception:
        return 256
    return 256 if "v5" in kind else 512


def _pick_block_b(B):
    if B <= 32:
        return max(8, _round_up(B, 8))
    # Keep >= 2 grid steps so the "parallel" batch axis can shard across the
    # two TensorCores on v7x; grow the tile only for very large batches.
    half = _round_up(-(-B // 2), 16)
    cap = _large_block_cap() if B >= 4096 else 256
    return max(16, min(cap, half))


# --------------------------------------------------------------------------- #
# Forward wrapper                                                             #
# --------------------------------------------------------------------------- #
def discrete_action_policy_forward(x, prepared, logit_clip=(-np.inf, np.inf)):
    """x: (B, input_size) f32. prepared: output of prepare_params().
    Returns (B, output_size) f32 clamped logits."""
    B, in_size = x.shape
    out_size = prepared["out_size"]
    out_pad = prepared["out_pad"]
    w1, b1 = prepared["w1"], prepared["b1"]
    w2, b2 = prepared["w2"], prepared["b2"]
    w3, b3 = prepared["w3"], prepared["b3"]

    block_b = _pick_block_b(B)
    grid = (pl.cdiv(B, block_b),)   # partial edge tile handled by Pallas; no pad copy

    # logit_clip must be concrete Python/NumPy scalars: clip is resolved at trace time.
    clip_lo, clip_hi = float(logit_clip[0]), float(logit_clip[1])
    kernel = functools.partial(
        _mlp_kernel,
        clip_lo=clip_lo, clip_hi=clip_hi,
        do_lo=bool(np.isfinite(clip_lo)), do_hi=bool(np.isfinite(clip_hi)))

    # Weights / biases: full blocks with a constant index_map -> DMA'd once and
    # VMEM-resident across batch-tile grid steps (no re-DMA).
    resident = lambda a: pl.BlockSpec(a.shape, lambda i: (0, 0))

    out = pl.pallas_call(
        kernel,
        out_shape=jax.ShapeDtypeStruct((B, out_pad), jnp.float32),
        grid=grid,
        in_specs=[
            pl.BlockSpec((block_b, in_size), lambda i: (i, 0)),   # x tile (f32)
            resident(w1), resident(b1),
            resident(w2), resident(b2),
            resident(w3), resident(b3),
        ],
        out_specs=pl.BlockSpec((block_b, out_pad), lambda i: (i, 0)),
        compiler_params=pltpu.CompilerParams(
            dimension_semantics=("parallel",)),
    )(x.astype(jnp.float32), w1, b1, w2, b2, w3, b3)

    # Rows past B (edge tile) and lanes past out_size (lane padding) are padding;
    # slice to the module's output shape. Downstream code that can mask padded
    # logits (e.g. before softmax/argmax) may consume `out` directly to skip
    # this copy.
    return out[:B, :out_size]


# --------------------------------------------------------------------------- #
# Init + f32 reference                                                        #
# --------------------------------------------------------------------------- #
def init_params(key, input_size, output_size, hidden_layers):
    """nn.Linear-style init (U[-1/sqrt(fan_in), 1/sqrt(fan_in)]).
    Weights stored pre-transposed as (in, out)."""
    sizes = [input_size] + list(hidden_layers) + [output_size]
    params = {}
    for i in range(len(sizes) - 1):
        fan_in, fan_out = sizes[i], sizes[i + 1]
        key, kw, kb = jax.random.split(key, 3)
        bound = 1.0 / np.sqrt(fan_in)
        params[f"w{i+1}"] = jax.random.uniform(
            kw, (fan_in, fan_out), jnp.float32, -bound, bound)
        params[f"b{i+1}"] = jax.random.uniform(
            kb, (1, fan_out), jnp.float32, -bound, bound)
    return params


def reference_forward(x, params, logit_clip):
    h = x
    h = jnp.maximum(h @ params["w1"] + params["b1"], 0.0)
    h = jnp.maximum(h @ params["w2"] + params["b2"], 0.0)
    logits = h @ params["w3"] + params["b3"]
    return jnp.clip(logits, logit_clip[0], logit_clip[1])


if __name__ == "__main__":
    # Module-consistent small shapes: batch=8, input_size=64,
    # hidden_layers default [256, 256], output_size=47 (mahjong action space).
    B, INPUT_SIZE, OUTPUT_SIZE = 8, 64, 47
    HIDDEN = [256, 256]
    LOGIT_CLIP = (-np.inf, np.inf)  # module default (clamp is a no-op then)

    key = jax.random.PRNGKey(0)
    key, kx = jax.random.split(key)
    x = jax.random.normal(kx, (B, INPUT_SIZE), jnp.float32)
    params = init_params(key, INPUT_SIZE, OUTPUT_SIZE, HIDDEN)

    # One-time param packing (bf16 cast + lane pad), reused across calls.
    prepared = prepare_params(params)

    out = discrete_action_policy_forward(x, prepared, LOGIT_CLIP)
    out = jax.block_until_ready(out)
    assert out.shape == (B, OUTPUT_SIZE), out.shape

    # f32 reference; kernel uses bf16 matmul operands with f32 accumulation,
    # so allow bf16-level tolerance.
    ref = reference_forward(x, params, LOGIT_CLIP)
    np.testing.assert_allclose(np.asarray(out), np.asarray(ref),
                               rtol=2e-2, atol=2e-2)

    # Finite-clip path.
    out_c = jax.block_until_ready(
        discrete_action_policy_forward(x, prepared, (-0.05, 0.05)))
    ref_c = reference_forward(x, params, (-0.05, 0.05))
    np.testing.assert_allclose(np.asarray(out_c), np.asarray(ref_c),
                               rtol=2e-2, atol=2e-2)

    # Edge-tile path: batch not a multiple of block_b (no explicit padding).
    key, kx2 = jax.random.split(key)
    x2 = jax.random.normal(kx2, (50, INPUT_SIZE), jnp.float32)
    out2 = jax.block_until_ready(
        discrete_action_policy_forward(x2, prepared, LOGIT_CLIP))
    assert out2.shape == (50, OUTPUT_SIZE), out2.shape
    ref2 = reference_forward(x2, params, LOGIT_CLIP)
    np.testing.assert_allclose(np.asarray(out2), np.asarray(ref2),
                               rtol=2e-2, atol=2e-2)

    print("KERNEL_OK")
</pallas_src>

<mosaic_0001>
module attributes {stable_mosaic.version = 11 : i64} {
  func.func @_mlp_kernel(%arg0: i32, %arg1: memref<8x64xf32, #tpu.memory_space<vmem>>, %arg2: memref<64x256xbf16, #tpu.memory_space<vmem>>, %arg3: memref<1x256xf32, #tpu.memory_space<vmem>>, %arg4: memref<256x256xbf16, #tpu.memory_space<vmem>>, %arg5: memref<1x256xf32, #tpu.memory_space<vmem>>, %arg6: memref<256x128xbf16, #tpu.memory_space<vmem>>, %arg7: memref<1x128xf32, #tpu.memory_space<vmem>>, %arg8: memref<8x128xf32, #tpu.memory_space<vmem>>) attributes {dimension_semantics = [#tpu.dimension_semantics<parallel>], iteration_bounds = array<i64: 1>, scalar_prefetch = 0 : i64, scratch_operands = 0 : i64, tpu.core_type = #tpu.core_type<tc>, window_params = [{transform_indices = @transform_0, window_bounds = array<i64: 8, 64>}, {pipeline_mode = #tpu.pipeline_mode<synchronous>, transform_indices = @transform_1, window_bounds = array<i64: 64, 256>}, {pipeline_mode = #tpu.pipeline_mode<synchronous>, transform_indices = @transform_2, window_bounds = array<i64: 1, 256>}, {pipeline_mode = #tpu.pipeline_mode<synchronous>, transform_indices = @transform_3, window_bounds = array<i64: 256, 256>}, {pipeline_mode = #tpu.pipeline_mode<synchronous>, transform_indices = @transform_4, window_bounds = array<i64: 1, 256>}, {pipeline_mode = #tpu.pipeline_mode<synchronous>, transform_indices = @transform_5, window_bounds = array<i64: 256, 128>}, {pipeline_mode = #tpu.pipeline_mode<synchronous>, transform_indices = @transform_6, window_bounds = array<i64: 1, 128>}, {transform_indices = @transform_7, window_bounds = array<i64: 8, 128>}]} {
    %c0 = arith.constant 0 : index
    %c0_0 = arith.constant 0 : index
    %0 = vector.load %arg1[%c0, %c0_0] : memref<8x64xf32, #tpu.memory_space<vmem>>, vector<8x64xf32>
    %1 = arith.truncf %0 : vector<8x64xf32> to vector<8x64xbf16>
    %c0_1 = arith.constant 0 : index
    %c0_2 = arith.constant 0 : index
    %2 = vector.load %arg2[%c0_1, %c0_2] : memref<64x256xbf16, #tpu.memory_space<vmem>>, vector<64x256xbf16>
    %cst = arith.constant dense<0.000000e+00> : vector<8x256xf32>
    %3 = tpu.matmul %1, %2, %cst {dimension_numbers = #tpu.dot_dimension_numbers<[1], [0], [0], [1], [0, 0, 1, 1], [], []>} : vector<8x64xbf16>, vector<64x256xbf16>, vector<8x256xf32> -> vector<8x256xf32>
    %c0_3 = arith.constant 0 : index
    %c0_4 = arith.constant 0 : index
    %4 = vector.load %arg3[%c0_3, %c0_4] : memref<1x256xf32, #tpu.memory_space<vmem>>, vector<1x256xf32>
    %5 = vector.broadcast %4 : vector<1x256xf32> to vector<8x256xf32>
    %6 = arith.addf %3, %5 : vector<8x256xf32>
    %cst_5 = arith.constant 0.000000e+00 : f32
    %7 = vector.broadcast %cst_5 : f32 to vector<8x256xf32>
    %8 = arith.maximumf %6, %7 : vector<8x256xf32>
    %9 = arith.truncf %8 : vector<8x256xf32> to vector<8x256xbf16>
    %c0_6 = arith.constant 0 : index
    %c0_7 = arith.constant 0 : index
    %10 = vector.load %arg4[%c0_6, %c0_7] : memref<256x256xbf16, #tpu.memory_space<vmem>>, vector<256x256xbf16>
    %cst_8 = arith.constant dense<0.000000e+00> : vector<8x256xf32>
    %11 = tpu.matmul %9, %10, %cst_8 {dimension_numbers = #tpu.dot_dimension_numbers<[1], [0], [0], [1], [0, 0, 1, 1], [], []>} : vector<8x256xbf16>, vector<256x256xbf16>, vector<8x256xf32> -> vector<8x256xf32>
    %c0_9 = arith.constant 0 : index
    %c0_10 = arith.constant 0 : index
    %12 = vector.load %arg5[%c0_9, %c0_10] : memref<1x256xf32, #tpu.memory_space<vmem>>, vector<1x256xf32>
    %13 = vector.broadcast %12 : vector<1x256xf32> to vector<8x256xf32>
    %14 = arith.addf %11, %13 : vector<8x256xf32>
    %cst_11 = arith.constant 0.000000e+00 : f32
    %15 = vector.broadcast %cst_11 : f32 to vector<8x256xf32>
    %16 = arith.maximumf %14, %15 : vector<8x256xf32>
    %17 = arith.truncf %16 : vector<8x256xf32> to vector<8x256xbf16>
    %c0_12 = arith.constant 0 : index
    %c0_13 = arith.constant 0 : index
    %18 = vector.load %arg6[%c0_12, %c0_13] : memref<256x128xbf16, #tpu.memory_space<vmem>>, vector<256x128xbf16>
    %cst_14 = arith.constant dense<0.000000e+00> : vector<8x128xf32>
    %19 = tpu.matmul %17, %18, %cst_14 {dimension_numbers = #tpu.dot_dimension_numbers<[1], [0], [0], [1], [0, 0, 1, 1], [], []>} : vector<8x256xbf16>, vector<256x128xbf16>, vector<8x128xf32> -> vector<8x128xf32>
    %c0_15 = arith.constant 0 : index
    %c0_16 = arith.constant 0 : index
    %20 = vector.load %arg7[%c0_15, %c0_16] : memref<1x128xf32, #tpu.memory_space<vmem>>, vector<1x128xf32>
    %21 = vector.broadcast %20 : vector<1x128xf32> to vector<8x128xf32>
    %22 = arith.addf %19, %21 : vector<8x128xf32>
    %c0_17 = arith.constant 0 : index
    %c0_18 = arith.constant 0 : index
    %23 = vector.load %arg8[%c0_17, %c0_18] : memref<8x128xf32, #tpu.memory_space<vmem>>, vector<8x128xf32>
    tpu.vector_store %arg8[%c0_17, %c0_18], %22 {strides = array<i32>} : memref<8x128xf32, #tpu.memory_space<vmem>>, vector<8x128xf32>,
    return
  }
  func.func @transform_0(%arg0: i32) -> (i32, i32) {
    %c0_i32 = arith.constant 0 : i32
    %c0_i32_0 = arith.constant 0 : i32
    return %arg0, %c0_i32 : i32, i32
  }
  func.func @transform_1(%arg0: i32) -> (i32, i32) {
    %c0_i32 = arith.constant 0 : i32
    %c0_i32_0 = arith.constant 0 : i32
    %c0_i32_1 = arith.constant 0 : i32
    return %c0_i32, %c0_i32_0 : i32, i32
  }
  func.func @transform_2(%arg0: i32) -> (i32, i32) {
    %c0_i32 = arith.constant 0 : i32
    %c0_i32_0 = arith.constant 0 : i32
    %c0_i32_1 = arith.constant 0 : i32
    return %c0_i32, %c0_i32_0 : i32, i32
  }
  func.func @transform_3(%arg0: i32) -> (i32, i32) {
    %c0_i32 = arith.constant 0 : i32
    %c0_i32_0 = arith.constant 0 : i32
    %c0_i32_1 = arith.constant 0 : i32
    return %c0_i32, %c0_i32_0 : i32, i32
  }
  func.func @transform_4(%arg0: i32) -> (i32, i32) {
    %c0_i32 = arith.constant 0 : i32
    %c0_i32_0 = arith.constant 0 : i32
    %c0_i32_1 = arith.constant 0 : i32
    return %c0_i32, %c0_i32_0 : i32, i32
  }
  func.func @transform_5(%arg0: i32) -> (i32, i32) {
    %c0_i32 = arith.constant 0 : i32
    %c0_i32_0 = arith.constant 0 : i32
    %c0_i32_1 = arith.constant 0 : i32
    return %c0_i32, %c0_i32_0 : i32, i32
  }
  func.func @transform_6(%arg0: i32) -> (i32, i32) {
    %c0_i32 = arith.constant 0 : i32
    %c0_i32_0 = arith.constant 0 : i32
    %c0_i32_1 = arith.constant 0 : i32
    return %c0_i32, %c0_i32_0 : i32, i32
  }
  func.func @transform_7(%arg0: i32) -> (i32, i32) {
    %c0_i32 = arith.constant 0 : i32
    %c0_i32_0 = arith.constant 0 : i32
    return %arg0, %c0_i32 : i32, i32
  }
}

</mosaic_0001>

<llo_original>
// kernel: tpu_custom_call.1
$region0: #{tpu_custom_call.1}
  #allocation0 [shape = 'u32[]', space=smem, size = 0x4, offset = 0x4, fixed_abs, tag = 'smem constant byte address 0x4 - core index']
  #allocation1 [shape = 'u32[72,128]{1,0:T(1,128)}', space=vmem, size = 0x9000, scoped, tag = 'internal scratch']
  %s0 = inlined_call_operand.hbm [shape: f32[8,64], index: 0, kind: input, shape index: {}]
  %s1 = inlined_call_operand.hbm [shape: bf16[64,256], index: 1, kind: input, shape index: {}]
  %s2 = inlined_call_operand.hbm [shape: f32[1,256], index: 2, kind: input, shape index: {}]
  %s3 = inlined_call_operand.hbm [shape: bf16[256,256], index: 3, kind: input, shape index: {}]
  %s4 = inlined_call_operand.vmem [shape: f32[1,256], index: 4, kind: input, shape index: {}]
  %s5 = inlined_call_operand.hbm [shape: bf16[256,128], index: 5, kind: input, shape index: {}]
  %s6 = inlined_call_operand.vmem [shape: f32[1,128], index: 6, kind: input, shape index: {}]
  %s7 = inlined_call_operand.hbm [shape: f32[8,128], index: 7, kind: output, shape index: {}]
  %s8 = sld [smem:[#allocation0]]
  $region58: #{tpu_custom_call.1} parent=0
    _
  %s10 = ssub.s32 1, %s8
  %s11 = scalar_select 0, %s10, %s8
  $region1: #{tpu_custom_call.1} parent=0
    #allocation2 [shape = 'u8[4096]{0}', space=vmem, size = 0x1000, scoped, tag = 'input window, operand 0, single buffered']
    #allocation3 [shape = 's32[1]{0}', space=sflag, size = 0x4, scoped, tag = 'scoped memory for tpu_custom_call.1']
    #allocation4 [shape = 's32[1]{0}', space=sflag, size = 0x4, scoped, tag = 'scoped memory for tpu_custom_call.1']
    #allocation5 [shape = 'u8[32768]{0}', space=vmem, size = 0x8000, scoped, tag = 'input window, operand 1, single buffered']
    #allocation6 [shape = 's32[1]{0}', space=sflag, size = 0x4, scoped, tag = 'scoped memory for tpu_custom_call.1']
    #allocation7 [shape = 'u8[1024]{0}', space=vmem, size = 0x400, scoped, tag = 'input window, operand 2, single buffered']
    #allocation8 [shape = 'u8[131072]{0}', space=vmem, size = 0x20000, scoped, tag = 'input window, operand 3, single buffered']
    #allocation9 [shape = 's32[1]{0}', space=sflag, size = 0x4, scoped, tag = 'scoped memory for tpu_custom_call.1']
    #allocation10 [shape = 'u8[65536]{0}', space=vmem, size = 0x10000, scoped, tag = 'input window, operand 5, single buffered']
    #allocation11 [shape = 'u8[4096]{0}', space=vmem, size = 0x1000, scoped, tag = 'output window, operand 0, single buffered']
    %12 = vsyncpa [#allocation3], 0
    %13 = vsyncpa [#allocation6], 0
    %14 = vsyncpa [#allocation9], 0
    %15 = vsyncpa [#allocation4], 0
    // Predicated region
    $region2: #{tpu_custom_call.1} parent=1 // pred_check
      _
    $region3: #{tpu_custom_call.1} parent=1 // pred_check_branch
      %17 = sbr.rel (0) target = $region5
    $region4: #{tpu_custom_call.1} parent=1 // pred_region
      %19 = vsyncadd [#allocation3], 0
      %s21 = sshll.u32 %s0, 4
      %s22 = int_to_ptr.hbm [resolvable:$true] %s21
      %s23 = sshll.u32 [#allocation2], 4
      %s24 = int_to_ptr.vmem [resolvable:$true] %s23
      %26 = dma.hbm_to_vmem [thread:$0]  %s22, 128, %s24, [#allocation3]
    $region5: #{tpu_custom_call.1} parent=1 // pred_fallthru
      _
    // Predicated region
    $region6: #{tpu_custom_call.1} parent=1 // pred_check
      _
    $region7: #{tpu_custom_call.1} parent=1 // pred_check_branch
      %28 = sbr.rel (0) target = $region9
    $region8: #{tpu_custom_call.1} parent=1 // pred_region
      %30 = vsyncadd [#allocation6], 0
      %s31 = sshll.u32 %s1, 4
      %s32 = int_to_ptr.hbm [resolvable:$true] %s31
      %s33 = sshll.u32 [#allocation5], 4
      %s34 = int_to_ptr.vmem [resolvable:$true] %s33
      %39 = dma.hbm_to_vmem [thread:$0]  %s32, 1024, %s34, [#allocation6], 128, 128, 8
    $region9: #{tpu_custom_call.1} parent=1 // pred_fallthru
      _
    // Predicated region
    $region10: #{tpu_custom_call.1} parent=1 // pred_check
      _
    $region11: #{tpu_custom_call.1} parent=1 // pred_check_branch
      %41 = sbr.rel (0) target = $region13
    $region12: #{tpu_custom_call.1} parent=1 // pred_region
      %43 = vsyncadd [#allocation6], 0
      %s45 = sshll.u32 %s2, 4
      %s46 = int_to_ptr.hbm [resolvable:$true] %s45
      %s47 = sshll.u32 [#allocation7], 4
      %s48 = int_to_ptr.vmem [resolvable:$true] %s47
      %50 = dma.hbm_to_vmem [thread:$0]  %s46, 32, %s48, [#allocation6]
    $region13: #{tpu_custom_call.1} parent=1 // pred_fallthru
      _
    // Predicated region
    $region14: #{tpu_custom_call.1} parent=1 // pred_check
      _
    $region15: #{tpu_custom_call.1} parent=1 // pred_check_branch
      %52 = sbr.rel (0) target = $region17
    $region16: #{tpu_custom_call.1} parent=1 // pred_region
      %54 = vsyncadd [#allocation9], 0
      %s55 = sshll.u32 %s3, 4
      %s56 = int_to_ptr.hbm [resolvable:$true] %s55
      %s57 = sshll.u32 [#allocation8], 4
      %s58 = int_to_ptr.vmem [resolvable:$true] %s57
      %63 = dma.hbm_to_vmem [thread:$0]  %s56, 4096, %s58, [#allocation9], 128, 128, 8
    $region17: #{tpu_custom_call.1} parent=1 // pred_fallthru
      _
    // Predicated region
    $region18: #{tpu_custom_call.1} parent=1 // pred_check
      _
    $region19: #{tpu_custom_call.1} parent=1 // pred_check_branch
      %65 = sbr.rel (0) target = $region21
    $region20: #{tpu_custom_call.1} parent=1 // pred_region
      _
    $region21: #{tpu_custom_call.1} parent=1 // pred_fallthru
      _
    // Predicated region
    $region22: #{tpu_custom_call.1} parent=1 // pred_check
      _
    $region23: #{tpu_custom_call.1} parent=1 // pred_check_branch
      %67 = sbr.rel (0) target = $region25
    $region24: #{tpu_custom_call.1} parent=1 // pred_region
      %69 = vsyncadd [#allocation9], 0
      %s70 = sshll.u32 %s5, 4
      %s71 = int_to_ptr.hbm [resolvable:$true] %s70
      %s72 = sshll.u32 [#allocation10], 4
      %s73 = int_to_ptr.vmem [resolvable:$true] %s72
      %78 = dma.hbm_to_vmem [thread:$0]  %s71, 2048, %s73, [#allocation9], 64, 64, 4
    $region25: #{tpu_custom_call.1} parent=1 // pred_fallthru
      _
    // Predicated region
    $region26: #{tpu_custom_call.1} parent=1 // pred_check
      _
    $region27: #{tpu_custom_call.1} parent=1 // pred_check_branch
      %80 = sbr.rel (0) target = $region29
    $region28: #{tpu_custom_call.1} parent=1 // pred_region
      _
    $region29: #{tpu_custom_call.1} parent=1 // pred_fallthru
      _
    // Predicated region
    $region30: #{tpu_custom_call.1} parent=1 // pred_check
      _
    $region31: #{tpu_custom_call.1} parent=1 // pred_check_branch
      %82 = sbr.rel (0) target = $region33
    $region32: #{tpu_custom_call.1} parent=1 // pred_region
      %84 = dma.done [#allocation3], 128
    $region33: #{tpu_custom_call.1} parent=1 // pred_fallthru
      _
    // Predicated region
    $region34: #{tpu_custom_call.1} parent=1 // pred_check
      _
    $region35: #{tpu_custom_call.1} parent=1 // pred_check_branch
      %86 = sbr.rel (0) target = $region37
    $region36: #{tpu_custom_call.1} parent=1 // pred_region
      %88 = dma.done [#allocation6], 1024
    $region37: #{tpu_custom_call.1} parent=1 // pred_fallthru
      _
    // Predicated region
    $region38: #{tpu_custom_call.1} parent=1 // pred_check
      _
    $region39: #{tpu_custom_call.1} parent=1 // pred_check_branch
      %90 = sbr.rel (0) target = $region41
    $region40: #{tpu_custom_call.1} parent=1 // pred_region
      %92 = dma.done [#allocation6], 32
    $region41: #{tpu_custom_call.1} parent=1 // pred_fallthru
      _
    // Predicated region
    $region42: #{tpu_custom_call.1} parent=1 // pred_check
      _
    $region43: #{tpu_custom_call.1} parent=1 // pred_check_branch
      %94 = sbr.rel (0) target = $region45
    $region44: #{tpu_custom_call.1} parent=1 // pred_region
      %96 = dma.done [#allocation9], 4096
    $region45: #{tpu_custom_call.1} parent=1 // pred_fallthru
      _
    // Predicated region
    $region46: #{tpu_custom_call.1} parent=1 // pred_check
      _
    $region47: #{tpu_custom_call.1} parent=1 // pred_check_branch
      %98 = sbr.rel (0) target = $region49
    $region48: #{tpu_custom_call.1} parent=1 // pred_region
      %100 = dma.done [#allocation9], 2048
    $region49: #{tpu_custom_call.1} parent=1 // pred_fallthru
      _
    %v102 = vld [vmem:[#allocation2] sm:$0xff]
    %v103 = vpack.c.bf16 %v102, %v102
    %v104 = vld [vmem:[#allocation5] sm:$0xff]
    %v105 = vld [vmem:[#allocation5 + $0x8] sm:$0xff]
    %v106 = vld [vmem:[#allocation5 + $0x10] sm:$0xff]
    %v107 = vld [vmem:[#allocation5 + $0x18] sm:$0xff]
    %v108 = vld [vmem:[#allocation5 + $0x20] sm:$0xff]
    %v109 = vld [vmem:[#allocation5 + $0x28] sm:$0xff]
    %v110 = vld [vmem:[#allocation5 + $0x30] sm:$0xff]
    %v111 = vld [vmem:[#allocation5 + $0x38] sm:$0xff]
    %v112 = vld [vmem:[#allocation7] sm:$0x3]
    %v114 = vperm.slane %v112, 0
    %v115 = vperm.slane %v112, 1
    %v126 = vunpack.c.l.b16 %v104
    %v127 = vunpack.c.h.b16 %v104
    %v128 = vunpack.c.l.b16 %v105
    %v129 = vunpack.c.h.b16 %v105
    %v130 = vunpack.c.l.b16 %v106
    %v131 = vunpack.c.h.b16 %v106
    %v132 = vunpack.c.l.b16 %v107
    %v133 = vunpack.c.h.b16 %v107
    %v134 = vunpack.c.l.b16 %v108
    %v135 = vunpack.c.h.b16 %v108
    %v136 = vunpack.c.l.b16 %v109
    %v137 = vunpack.c.h.b16 %v109
    %v138 = vunpack.c.l.b16 %v110
    %v139 = vunpack.c.h.b16 %v110
    %v140 = vunpack.c.l.b16 %v111
    %v141 = vunpack.c.h.b16 %v111
    %v142 = vpack.c.b16 %v128, %v126
    %v143 = vpack.c.b16 %v129, %v127
    %v144 = vpack.c.b16 %v132, %v130
    %v145 = vpack.c.b16 %v133, %v131
    %v146 = vpack.c.b16 %v136, %v134
    %v147 = vpack.c.b16 %v137, %v135
    %v148 = vpack.c.b16 %v140, %v138
    %v149 = vpack.c.b16 %v141, %v139
    %vm158 = vcmask 523264
    %v160 = vsel %vm158, %v103, 0
    %162 = vmatpush.bf16.msra.mxu0 0
    %163 = vmatpush.bf16.msra.mxu0 0
    %164 = vmatpush.bf16.msra.mxu0 0
    %165 = vmatpush.bf16.msra.mxu0 0
    %166 = vmatpush.bf16.msra.mxu0 %v148
    %167 = vmatpush.bf16.msra.mxu0 %v146
    %168 = vmatpush.bf16.msra.mxu0 %v144
    %169 = vmatpush.bf16.msra.mxu0 %v142
    %170 = vmatmul.bf16.gmra.mxu0 %v160
    %v171 = vpop.f32.mrf.mxu0
    %v172 = vadd.f32 %v114, %v171
    %v173 = vpop.f32.mrf.mxu0
    %174 = vdwg.mxu0
    %175 = vmatpush.bf16.msra.mxu0 0
    %176 = vmatpush.bf16.msra.mxu0 0
    %177 = vmatpush.bf16.msra.mxu0 0
    %178 = vmatpush.bf16.msra.mxu0 0
    %179 = vmatpush.bf16.msra.mxu0 %v149
    %180 = vmatpush.bf16.msra.mxu0 %v147
    %181 = vmatpush.bf16.msra.mxu0 %v145
    %182 = vmatpush.bf16.msra.mxu0 %v143
    %183 = vmatmul.bf16.gmra.mxu0 %v160
    %v184 = vpop.f32.mrf.mxu0
    %v185 = vadd.f32 %v115, %v184
    %v186 = vpop.f32.mrf.mxu0
    %187 = vdwg.mxu0
    %v188 = vmax.f32 %v172, 0.0
    %v189 = vmax.f32 %v185, 0.0
    %v190 = vpack.c.bf16 %v188, %v188
    %v191 = vpack.c.bf16 %v189, %v189
    %v192 = vld [vmem:[#allocation8] sm:$0xff]
    %v193 = vld [vmem:[#allocation8 + $0x8] sm:$0xff]
    %v194 = vld [vmem:[#allocation8 + $0x10] sm:$0xff]
    %v195 = vld [vmem:[#allocation8 + $0x18] sm:$0xff]
    %v196 = vld [vmem:[#allocation8 + $0x20] sm:$0xff]
    %v197 = vld [vmem:[#allocation8 + $0x28] sm:$0xff]
    %v198 = vld [vmem:[#allocation8 + $0x30] sm:$0xff]
    %v199 = vld [vmem:[#allocation8 + $0x38] sm:$0xff]
    %v200 = vld [vmem:[#allocation8 + $0x40] sm:$0xff]
    %v201 = vld [vmem:[#allocation8 + $0x48] sm:$0xff]
    %v202 = vld [vmem:[#allocation8 + $0x50] sm:$0xff]
    %v203 = vld [vmem:[#allocation8 + $0x58] sm:$0xff]
    %v204 = vld [vmem:[#allocation8 + $0x60] sm:$0xff]
    %v205 = vld [vmem:[#allocation8 + $0x68] sm:$0xff]
    %v206 = vld [vmem:[#allocation8 + $0x70] sm:$0xff]
    %v207 = vld [vmem:[#allocation8 + $0x78] sm:$0xff]
    %v208 = vld [vmem:[#allocation8 + $0x80] sm:$0xff]
    %v209 = vld [vmem:[#allocation8 + $0x88] sm:$0xff]
    %v210 = vld [vmem:[#allocation8 + $0x90] sm:$0xff]
    %v211 = vld [vmem:[#allocation8 + $0x98] sm:$0xff]
    %v212 = vld [vmem:[#allocation8 + $0xa0] sm:$0xff]
    %v213 = vld [vmem:[#allocation8 + $0xa8] sm:$0xff]
    %v214 = vld [vmem:[#allocation8 + $0xb0] sm:$0xff]
    %v215 = vld [vmem:[#allocation8 + $0xb8] sm:$0xff]
    %v216 = vld [vmem:[#allocation8 + $0xc0] sm:$0xff]
    %v217 = vld [vmem:[#allocation8 + $0xc8] sm:$0xff]
    %v218 = vld [vmem:[#allocation8 + $0xd0] sm:$0xff]
    %v219 = vld [vmem:[#allocation8 + $0xd8] sm:$0xff]
    %v220 = vld [vmem:[#allocation8 + $0xe0] sm:$0xff]
    %v221 = vld [vmem:[#allocation8 + $0xe8] sm:$0xff]
    %v222 = vld [vmem:[#allocation8 + $0xf0] sm:$0xff]
    %v223 = vld [vmem:[#allocation8 + $0xf8] sm:$0xff]
    %v224 = vld [vmem:[%s4] sm:$0x3]
    %v226 = vperm.slane %v224, 0
    %v227 = vperm.slane %v224, 1
    %v262 = vunpack.c.l.b16 %v192
    %v263 = vunpack.c.h.b16 %v192
    %v264 = vunpack.c.l.b16 %v193
    %v265 = vunpack.c.h.b16 %v193
    %v266 = vunpack.c.l.b16 %v194
    %v267 = vunpack.c.h.b16 %v194
    %v268 = vunpack.c.l.b16 %v195
    %v269 = vunpack.c.h.b16 %v195
    %v270 = vunpack.c.l.b16 %v196
    %v271 = vunpack.c.h.b16 %v196
    %v272 = vunpack.c.l.b16 %v197
    %v273 = vunpack.c.h.b16 %v197
    %v274 = vunpack.c.l.b16 %v198
    %v275 = vunpack.c.h.b16 %v198
    %v276 = vunpack.c.l.b16 %v199
    %v277 = vunpack.c.h.b16 %v199
    %v278 = vunpack.c.l.b16 %v200
    %v279 = vunpack.c.h.b16 %v200
    %v280 = vunpack.c.l.b16 %v201
    %v281 = vunpack.c.h.b16 %v201
    %v282 = vunpack.c.l.b16 %v202
    %v283 = vunpack.c.h.b16 %v202
    %v284 = vunpack.c.l.b16 %v203
    %v285 = vunpack.c.h.b16 %v203
    %v286 = vunpack.c.l.b16 %v204
    %v287 = vunpack.c.h.b16 %v204
    %v288 = vunpack.c.l.b16 %v205
    %v289 = vunpack.c.h.b16 %v205
    %v290 = vunpack.c.l.b16 %v206
    %v291 = vunpack.c.h.b16 %v206
    %v292 = vunpack.c.l.b16 %v207
    %v293 = vunpack.c.h.b16 %v207
    %v294 = vunpack.c.l.b16 %v208
    %v295 = vunpack.c.h.b16 %v208
    %v296 = vunpack.c.l.b16 %v209
    %v297 = vunpack.c.h.b16 %v209
    %v298 = vunpack.c.l.b16 %v210
    %v299 = vunpack.c.h.b16 %v210
    %v300 = vunpack.c.l.b16 %v211
    %v301 = vunpack.c.h.b16 %v211
    %v302 = vunpack.c.l.b16 %v212
    %v303 = vunpack.c.h.b16 %v212
    %v304 = vunpack.c.l.b16 %v213
    %v305 = vunpack.c.h.b16 %v213
    %v306 = vunpack.c.l.b16 %v214
    %v307 = vunpack.c.h.b16 %v214
    %v308 = vunpack.c.l.b16 %v215
    %v309 = vunpack.c.h.b16 %v215
    %v310 = vunpack.c.l.b16 %v216
    %v311 = vunpack.c.h.b16 %v216
    %v312 = vunpack.c.l.b16 %v217
    %v313 = vunpack.c.h.b16 %v217
    %v314 = vunpack.c.l.b16 %v218
    %v315 = vunpack.c.h.b16 %v218
    %v316 = vunpack.c.l.b16 %v219
    %v317 = vunpack.c.h.b16 %v219
    %v318 = vunpack.c.l.b16 %v220
    %v319 = vunpack.c.h.b16 %v220
    %v320 = vunpack.c.l.b16 %v221
    %v321 = vunpack.c.h.b16 %v221
    %v322 = vunpack.c.l.b16 %v222
    %v323 = vunpack.c.h.b16 %v222
    %v324 = vunpack.c.l.b16 %v223
    %v325 = vunpack.c.h.b16 %v223
    %v326 = vpack.c.b16 %v264, %v262
    %v327 = vpack.c.b16 %v265, %v263
    %v328 = vpack.c.b16 %v268, %v266
    %v329 = vpack.c.b16 %v269, %v267
    %v330 = vpack.c.b16 %v272, %v270
    %v331 = vpack.c.b16 %v273, %v271
    %v332 = vpack.c.b16 %v276, %v274
    %v333 = vpack.c.b16 %v277, %v275
    %v334 = vpack.c.b16 %v280, %v278
    %v335 = vpack.c.b16 %v281, %v279
    %v336 = vpack.c.b16 %v284, %v282
    %v337 = vpack.c.b16 %v285, %v283
    %v338 = vpack.c.b16 %v288, %v286
    %v339 = vpack.c.b16 %v289, %v287
    %v340 = vpack.c.b16 %v292, %v290
    %v341 = vpack.c.b16 %v293, %v291
    %v342 = vpack.c.b16 %v296, %v294
    %v343 = vpack.c.b16 %v297, %v295
    %v344 = vpack.c.b16 %v300, %v298
    %v345 = vpack.c.b16 %v301, %v299
    %v346 = vpack.c.b16 %v304, %v302
    %v347 = vpack.c.b16 %v305, %v303
    %v348 = vpack.c.b16 %v308, %v306
    %v349 = vpack.c.b16 %v309, %v307
    %v350 = vpack.c.b16 %v312, %v310
    %v351 = vpack.c.b16 %v313, %v311
    %v352 = vpack.c.b16 %v316, %v314
    %v353 = vpack.c.b16 %v317, %v315
    %v354 = vpack.c.b16 %v320, %v318
    %v355 = vpack.c.b16 %v321, %v319
    %v356 = vpack.c.b16 %v324, %v322
    %v357 = vpack.c.b16 %v325, %v323
    %390 = vmatpush.bf16.msra.mxu0 %v340
    %391 = vmatpush.bf16.msra.mxu0 %v338
    %392 = vmatpush.bf16.msra.mxu0 %v336
    %393 = vmatpush.bf16.msra.mxu0 %v334
    %394 = vmatpush.bf16.msra.mxu0 %v332
    %395 = vmatpush.bf16.msra.mxu0 %v330
    %396 = vmatpush.bf16.msra.mxu0 %v328
    %397 = vmatpush.bf16.msra.mxu0 %v326
    %398 = vmatmul.bf16.gmra.mxu0 %v190
    %v399 = vpop.f32.mrf.mxu0
    %v400 = vadd.f32 %v226, %v399
    %v401 = vpop.f32.mrf.mxu0
    %402 = vdwg.mxu0
    %403 = vmatpush.bf16.msra.mxu0 %v356
    %404 = vmatpush.bf16.msra.mxu0 %v354
    %405 = vmatpush.bf16.msra.mxu0 %v352
    %406 = vmatpush.bf16.msra.mxu0 %v350
    %407 = vmatpush.bf16.msra.mxu0 %v348
    %408 = vmatpush.bf16.msra.mxu0 %v346
    %409 = vmatpush.bf16.msra.mxu0 %v344
    %410 = vmatpush.bf16.msra.mxu0 %v342
    %411 = vmatmul.bf16.gmra.mxu0 %v191
    %v412 = vpop.f32.mrf.mxu0
    %v413 = vadd.f32 %v400, %v412
    %v414 = vpop.f32.mrf.mxu0
    %415 = vdwg.mxu0
    %416 = vmatpush.bf16.msra.mxu0 %v341
    %417 = vmatpush.bf16.msra.mxu0 %v339
    %418 = vmatpush.bf16.msra.mxu0 %v337
    %419 = vmatpush.bf16.msra.mxu0 %v335
    %420 = vmatpush.bf16.msra.mxu0 %v333
    %421 = vmatpush.bf16.msra.mxu0 %v331
    %422 = vmatpush.bf16.msra.mxu0 %v329
    %423 = vmatpush.bf16.msra.mxu0 %v327
    %424 = vmatmul.bf16.gmra.mxu0 %v190
    %v425 = vpop.f32.mrf.mxu0
    %v426 = vadd.f32 %v227, %v425
    %v427 = vpop.f32.mrf.mxu0
    %428 = vdwg.mxu0
    %429 = vmatpush.bf16.msra.mxu0 %v357
    %430 = vmatpush.bf16.msra.mxu0 %v355
    %431 = vmatpush.bf16.msra.mxu0 %v353
    %432 = vmatpush.bf16.msra.mxu0 %v351
    %433 = vmatpush.bf16.msra.mxu0 %v349
    %434 = vmatpush.bf16.msra.mxu0 %v347
    %435 = vmatpush.bf16.msra.mxu0 %v345
    %436 = vmatpush.bf16.msra.mxu0 %v343
    %437 = vmatmul.bf16.gmra.mxu0 %v191
    %v438 = vpop.f32.mrf.mxu0
    %v439 = vadd.f32 %v426, %v438
    %v440 = vpop.f32.mrf.mxu0
    %441 = vdwg.mxu0
    %v442 = vmax.f32 %v413, 0.0
    %v443 = vmax.f32 %v439, 0.0
    %v444 = vpack.c.bf16 %v442, %v442
    %v445 = vpack.c.bf16 %v443, %v443
    %v446 = vld [vmem:[#allocation10] sm:$0xf]
    %v447 = vld [vmem:[#allocation10 + $0x4] sm:$0xf]
    %v448 = vld [vmem:[#allocation10 + $0x8] sm:$0xf]
    %v449 = vld [vmem:[#allocation10 + $0xc] sm:$0xf]
    %v450 = vld [vmem:[#allocation10 + $0x10] sm:$0xf]
    %v451 = vld [vmem:[#allocation10 + $0x14] sm:$0xf]
    %v452 = vld [vmem:[#allocation10 + $0x18] sm:$0xf]
    %v453 = vld [vmem:[#allocation10 + $0x1c] sm:$0xf]
    %v454 = vld [vmem:[#allocation10 + $0x20] sm:$0xf]
    %v455 = vld [vmem:[#allocation10 + $0x24] sm:$0xf]
    %v456 = vld [vmem:[#allocation10 + $0x28] sm:$0xf]
    %v457 = vld [vmem:[#allocation10 + $0x2c] sm:$0xf]
    %v458 = vld [vmem:[#allocation10 + $0x30] sm:$0xf]
    %v459 = vld [vmem:[#allocation10 + $0x34] sm:$0xf]
    %v460 = vld [vmem:[#allocation10 + $0x38] sm:$0xf]
    %v461 = vld [vmem:[#allocation10 + $0x3c] sm:$0xf]
    %v462 = vld [vmem:[#allocation10 + $0x40] sm:$0xf]
    %v463 = vld [vmem:[#allocation10 + $0x44] sm:$0xf]
    %v464 = vld [vmem:[#allocation10 + $0x48] sm:$0xf]
    %v465 = vld [vmem:[#allocation10 + $0x4c] sm:$0xf]
    %v466 = vld [vmem:[#allocation10 + $0x50] sm:$0xf]
    %v467 = vld [vmem:[#allocation10 + $0x54] sm:$0xf]
    %v468 = vld [vmem:[#allocation10 + $0x58] sm:$0xf]
    %v469 = vld [vmem:[#allocation10 + $0x5c] sm:$0xf]
    %v470 = vld [vmem:[#allocation10 + $0x60] sm:$0xf]
    %v471 = vld [vmem:[#allocation10 + $0x64] sm:$0xf]
    %v472 = vld [vmem:[#allocation10 + $0x68] sm:$0xf]
    %v473 = vld [vmem:[#allocation10 + $0x6c] sm:$0xf]
    %v474 = vld [vmem:[#allocation10 + $0x70] sm:$0xf]
    %v475 = vld [vmem:[#allocation10 + $0x74] sm:$0xf]
    %v476 = vld [vmem:[#allocation10 + $0x78] sm:$0xf]
    %v477 = vld [vmem:[#allocation10 + $0x7c] sm:$0xf]
    %v478 = vld [vmem:[%s6] sm:$0x1]
    %v480 = vperm.slane %v478, 0
    %v514 = vunpack.c.l.b16 %v446
    %v515 = vunpack.c.l.b16 %v447
    %v516 = vunpack.c.l.b16 %v448
    %v517 = vunpack.c.l.b16 %v449
    %v518 = vunpack.c.l.b16 %v450
    %v519 = vunpack.c.l.b16 %v451
    %v520 = vunpack.c.l.b16 %v452
    %v521 = vunpack.c.l.b16 %v453
    %v522 = vunpack.c.l.b16 %v454
    %v523 = vunpack.c.l.b16 %v455
    %v524 = vunpack.c.l.b16 %v456
    %v525 = vunpack.c.l.b16 %v457
    %v526 = vunpack.c.l.b16 %v458
    %v527 = vunpack.c.l.b16 %v459
    %v528 = vunpack.c.l.b16 %v460
    %v529 = vunpack.c.l.b16 %v461
    %v530 = vunpack.c.l.b16 %v462
    %v531 = vunpack.c.l.b16 %v463
    %v532 = vunpack.c.l.b16 %v464
    %v533 = vunpack.c.l.b16 %v465
    %v534 = vunpack.c.l.b16 %v466
    %v535 = vunpack.c.l.b16 %v467
    %v536 = vunpack.c.l.b16 %v468
    %v537 = vunpack.c.l.b16 %v469
    %v538 = vunpack.c.l.b16 %v470
    %v539 = vunpack.c.l.b16 %v471
    %v540 = vunpack.c.l.b16 %v472
    %v541 = vunpack.c.l.b16 %v473
    %v542 = vunpack.c.l.b16 %v474
    %v543 = vunpack.c.l.b16 %v475
    %v544 = vunpack.c.l.b16 %v476
    %v545 = vunpack.c.l.b16 %v477
    %v546 = vpack.c.b16 %v515, %v514
    %v547 = vpack.c.b16 %v517, %v516
    %v548 = vpack.c.b16 %v519, %v518
    %v549 = vpack.c.b16 %v521, %v520
    %v550 = vpack.c.b16 %v523, %v522
    %v551 = vpack.c.b16 %v525, %v524
    %v552 = vpack.c.b16 %v527, %v526
    %v553 = vpack.c.b16 %v529, %v528
    %v554 = vpack.c.b16 %v531, %v530
    %v555 = vpack.c.b16 %v533, %v532
    %v556 = vpack.c.b16 %v535, %v534
    %v557 = vpack.c.b16 %v537, %v536
    %v558 = vpack.c.b16 %v539, %v538
    %v559 = vpack.c.b16 %v541, %v540
    %v560 = vpack.c.b16 %v543, %v542
    %v561 = vpack.c.b16 %v545, %v544
    %578 = vmatpush.bf16.msra.mxu0 %v553
    %579 = vmatpush.bf16.msra.mxu0 %v552
    %580 = vmatpush.bf16.msra.mxu0 %v551
    %581 = vmatpush.bf16.msra.mxu0 %v550
    %582 = vmatpush.bf16.msra.mxu0 %v549
    %583 = vmatpush.bf16.msra.mxu0 %v548
    %584 = vmatpush.bf16.msra.mxu0 %v547
    %585 = vmatpush.bf16.msra.mxu0 %v546
    %586 = vmatmul.bf16.gmra.mxu0 %v444
    %v587 = vpop.f32.mrf.mxu0
    %v588 = vadd.f32 %v480, %v587
    %v589 = vpop.f32.mrf.mxu0
    %590 = vdwg.mxu0
    %591 = vmatpush.bf16.msra.mxu0 %v561
    %592 = vmatpush.bf16.msra.mxu0 %v560
    %593 = vmatpush.bf16.msra.mxu0 %v559
    %594 = vmatpush.bf16.msra.mxu0 %v558
    %595 = vmatpush.bf16.msra.mxu0 %v557
    %596 = vmatpush.bf16.msra.mxu0 %v556
    %597 = vmatpush.bf16.msra.mxu0 %v555
    %598 = vmatpush.bf16.msra.mxu0 %v554
    %599 = vmatmul.bf16.gmra.mxu0 %v445
    %v600 = vpop.f32.mrf.mxu0
    %v601 = vadd.f32 %v588, %v600
    %v602 = vpop.f32.mrf.mxu0
    %603 = vdwg.mxu0
    %604 = vst [vmem:[#allocation11] sm:$0xff] %v601
    // Predicated region
    $region50: #{tpu_custom_call.1} parent=1 // pred_check
      _
    $region51: #{tpu_custom_call.1} parent=1 // pred_check_branch
      %606 = sbr.rel (0) target = $region53
    $region52: #{tpu_custom_call.1} parent=1 // pred_region
      %608 = vsyncadd [#allocation4], 0
      %s610 = sshll.u32 [#allocation11], 4
      %s611 = int_to_ptr.vmem [resolvable:$true] %s610
      %s612 = sshll.u32 %s7, 4
      %s613 = int_to_ptr.hbm [resolvable:$true] %s612
      %615 = dma.vmem_to_hbm [thread:$0]  %s611, 128, %s613, [#allocation4]
    $region53: #{tpu_custom_call.1} parent=1 // pred_fallthru
      _
    // Predicated region
    $region54: #{tpu_custom_call.1} parent=1 // pred_check
      _
    $region55: #{tpu_custom_call.1} parent=1 // pred_check_branch
      %617 = sbr.rel (0) target = $region57
    $region56: #{tpu_custom_call.1} parent=1 // pred_region
      %619 = dma.done [#allocation4], 128
    $region57: #{tpu_custom_call.1} parent=1 // pred_fallthru
      _
    %620 = vsyncpa [#allocation3], 1
    %621 = vsyncpa [#allocation6], 1
    %622 = vsyncpa [#allocation9], 1
    %623 = vsyncpa [#allocation4], 1

</llo_original>
